<compile_context>
chip_gen: v5e
topology: v5e:2x2
jax: 0.10.0
libtpu: 0.0.40
codegen_flags: <defaults>
</compile_context>

<pallas_src>
import jax
import jax.numpy as jnp
from jax.experimental import pallas as pl
from jax.experimental.pallas import tpu as pltpu

LANE = 128
SUBLANE = 16          # bf16 sublane packing
TB_MAX = 1024         # batch-tile cap (keeps footprint small even on v7x)


def _round_up(n, m):
    return (n + m - 1) // m * m


def _choose_batch_tile(B):
    """Pick the batch tile.

    - Tiny batches: one full-extent block (block dim == array dim is always
      legal, no padding needed).
    - Otherwise: biggest tile <= TB_MAX, but always >= 2 grid steps so the
      'parallel' batch axis can shard across v7x's two TensorCores.
    """
    if B <= 2 * SUBLANE:
        return B
    n_tiles = max(2, pl.cdiv(B, TB_MAX))
    tb = _round_up(pl.cdiv(B, n_tiles), SUBLANE)
    return min(TB_MAX, tb)


def classblock_kernel(x_ref, w1_ref, b1_ref, w2_ref, b2_ref, out_ref):
    # Bottleneck Linear (BN already folded into w1/b1); bf16 MXU inputs,
    # f32 accumulation.
    x = x_ref[...].astype(w1_ref.dtype)
    h = jnp.dot(x, w1_ref[...], preferred_element_type=jnp.float32) + b1_ref[...]
    # LeakyReLU(0.1): max(h, 0.1*h) (equivalent to where() for slope < 1).
    h = jnp.maximum(h, 0.1 * h)
    # Dropout(p=0.5): identity in eval mode.
    # Classifier Linear (output dim pre-padded to a 128-lane multiple).
    out = jnp.dot(h.astype(w2_ref.dtype), w2_ref[...],
                  preferred_element_type=jnp.float32) + b2_ref[...]
    out_ref[...] = out.astype(out_ref.dtype)


def prepare_params(params, *, eps=1e-5, compute_dtype=jnp.bfloat16):
    """Fold BatchNorm1d (eval) into the first Linear; pad only the classifier
    output dim to a 128-lane multiple. One-time prep, not in the hot path."""
    w1, b1, gamma, beta, run_mean, run_var, w2, b2 = params
    D_in, H = w1.shape
    C = w2.shape[1]

    scale = gamma / jnp.sqrt(run_var + eps)            # (H,)
    shift = beta - run_mean * scale                    # (H,)
    w1f = (w1 * scale[None, :]).astype(compute_dtype)  # (D_in, H), no K padding
    b1f = (b1 * scale + shift).reshape(1, H).astype(jnp.float32)

    C_pad = _round_up(C, LANE)
    w2p = jnp.zeros((H, C_pad), compute_dtype).at[:, :C].set(
        w2.astype(compute_dtype))
    b2p = jnp.zeros((1, C_pad), jnp.float32).at[0, :C].set(
        b2.astype(jnp.float32))

    return {
        "w1": w1f, "b1": b1f, "w2": w2p, "b2": b2p,
        "D_in": D_in, "H": H, "C": C, "C_pad": C_pad,
        "compute_dtype": compute_dtype,
    }


def class_block_forward(x, prep):
    """x: (B, input_dim) float32. Returns (B, class_num) float32."""
    w1, b1, w2, b2 = prep["w1"], prep["b1"], prep["w2"], prep["b2"]
    D_in, H, C, C_pad = prep["D_in"], prep["H"], prep["C"], prep["C_pad"]
    cdt = prep["compute_dtype"]

    B = x.shape[0]
    TB = _choose_batch_tile(B)
    grid = (pl.cdiv(B, TB),)       # ragged last tile masked by Pallas on write

    wbytes = jnp.dtype(cdt).itemsize
    # Footprint: every input/output spec is double-buffered by default
    # (including the constant-index resident weights), plus the f32
    # intermediate h tile.
    footprint = (
        2 * (D_in * H * wbytes            # w1 (x2 buffers)
             + H * C_pad * wbytes         # w2
             + H * 4 + C_pad * 4          # b1, b2 (f32)
             + TB * D_in * 4              # x tile (f32)
             + TB * C_pad * wbytes)       # out tile (bf16)
        + TB * H * 4                      # intermediate h (f32)
    )
    vmem_limit = min(48 << 20, max(16 << 20, 2 * footprint))

    flops = 2 * B * H * (D_in + C_pad)
    bytes_accessed = (B * D_in * 4 + B * C_pad * wbytes
                      + D_in * H * wbytes + H * C_pad * wbytes
                      + H * 4 + C_pad * 4)

    out_pad = pl.pallas_call(
        classblock_kernel,
        out_shape=jax.ShapeDtypeStruct((B, C_pad), cdt),
        grid=grid,
        in_specs=[
            pl.BlockSpec((TB, D_in), lambda i: (i, 0)),   # x tile per step
            pl.BlockSpec((D_in, H), lambda i: (0, 0)),    # w1 resident
            pl.BlockSpec((1, H), lambda i: (0, 0)),       # b1 resident
            pl.BlockSpec((H, C_pad), lambda i: (0, 0)),   # w2 resident
            pl.BlockSpec((1, C_pad), lambda i: (0, 0)),   # b2 resident
        ],
        out_specs=pl.BlockSpec((TB, C_pad), lambda i: (i, 0)),
        compiler_params=pltpu.CompilerParams(
            dimension_semantics=("parallel",),
            vmem_limit_bytes=int(vmem_limit)),
        cost_estimate=pl.CostEstimate(
            flops=int(flops), transcendentals=0,
            bytes_accessed=int(bytes_accessed)),
    )(x, w1, b1, w2, b2)

    return out_pad[:, :C].astype(jnp.float32)


def init_params(key, input_dim, class_num, num_bottleneck=512):
    k1, k2, k3 = jax.random.split(key, 3)
    # Linear(input_dim, num_bottleneck), kaiming_normal_ (a=0, mode='fan_out')
    # PyTorch weight shape (out, in); fan_out = num_bottleneck; std = sqrt(2/fan_out)
    std1 = (2.0 / num_bottleneck) ** 0.5
    w1 = (std1 * jax.random.normal(k1, (input_dim, num_bottleneck))).astype(jnp.float32)
    b1 = jnp.zeros((num_bottleneck,), jnp.float32)
    # BatchNorm1d(num_bottleneck): weight ~ N(1, 0.02), bias = 0, running stats 0/1
    gamma = (1.0 + 0.02 * jax.random.normal(k2, (num_bottleneck,))).astype(jnp.float32)
    beta = jnp.zeros((num_bottleneck,), jnp.float32)
    run_mean = jnp.zeros((num_bottleneck,), jnp.float32)
    run_var = jnp.ones((num_bottleneck,), jnp.float32)
    # Linear(num_bottleneck, class_num): weight ~ N(0, 0.001), bias = 0
    w2 = (0.001 * jax.random.normal(k3, (num_bottleneck, class_num))).astype(jnp.float32)
    b2 = jnp.zeros((class_num,), jnp.float32)
    return (w1, b1, gamma, beta, run_mean, run_var, w2, b2)


def reference_forward(x, params):
    """Pure-JAX f32 reference (eval-mode BatchNorm, identity dropout)."""
    w1, b1, gamma, beta, run_mean, run_var, w2, b2 = params
    eps = 1e-5
    h = x @ w1 + b1
    h = (h - run_mean) / jnp.sqrt(run_var + eps) * gamma + beta
    h = jnp.where(h >= 0.0, h, 0.1 * h)
    return h @ w2 + b2


if __name__ == "__main__":
    key = jax.random.PRNGKey(0)
    kx, kp = jax.random.split(key)

    B, input_dim, class_num, num_bottleneck = 8, 32, 16, 512
    x = jax.random.normal(kx, (B, input_dim), dtype=jnp.float32)
    params = init_params(kp, input_dim, class_num, num_bottleneck)

    prep = prepare_params(params)          # one-time BN fold + C padding + bf16 cast
    out = class_block_forward(x, prep)
    out = jax.block_until_ready(out)

    ref = reference_forward(x, params)
    assert out.shape == (B, class_num)
    # bf16 matmul inputs / bf16 output with f32 accumulation: loosened tolerance.
    assert jnp.allclose(out, ref, atol=2e-3, rtol=5e-2), "mismatch vs reference"

    print("KERNEL_OK")
</pallas_src>

<mosaic_0001>
module attributes {stable_mosaic.version = 11 : i64} {
  func.func @classblock_kernel(%arg0: i32, %arg1: memref<8x32xf32, #tpu.memory_space<vmem>>, %arg2: memref<32x512xbf16, #tpu.memory_space<vmem>>, %arg3: memref<1x512xf32, #tpu.memory_space<vmem>>, %arg4: memref<512x128xbf16, #tpu.memory_space<vmem>>, %arg5: memref<1x128xf32, #tpu.memory_space<vmem>>, %arg6: memref<8x128xbf16, #tpu.memory_space<vmem>>) attributes {dimension_semantics = [#tpu.dimension_semantics<parallel>], iteration_bounds = array<i64: 1>, scalar_prefetch = 0 : i64, scratch_operands = 0 : i64, tpu.core_type = #tpu.core_type<tc>, window_params = [{transform_indices = @transform_0, window_bounds = array<i64: 8, 32>}, {pipeline_mode = #tpu.pipeline_mode<synchronous>, transform_indices = @transform_1, window_bounds = array<i64: 32, 512>}, {pipeline_mode = #tpu.pipeline_mode<synchronous>, transform_indices = @transform_2, window_bounds = array<i64: 1, 512>}, {pipeline_mode = #tpu.pipeline_mode<synchronous>, transform_indices = @transform_3, window_bounds = array<i64: 512, 128>}, {pipeline_mode = #tpu.pipeline_mode<synchronous>, transform_indices = @transform_4, window_bounds = array<i64: 1, 128>}, {transform_indices = @transform_5, window_bounds = array<i64: 8, 128>}]} {
    %c0 = arith.constant 0 : index
    %c0_0 = arith.constant 0 : index
    %0 = vector.load %arg1[%c0, %c0_0] : memref<8x32xf32, #tpu.memory_space<vmem>>, vector<8x32xf32>
    %1 = arith.truncf %0 : vector<8x32xf32> to vector<8x32xbf16>
    %c0_1 = arith.constant 0 : index
    %c0_2 = arith.constant 0 : index
    %2 = vector.load %arg2[%c0_1, %c0_2] : memref<32x512xbf16, #tpu.memory_space<vmem>>, vector<32x512xbf16>
    %cst = arith.constant dense<0.000000e+00> : vector<8x512xf32>
    %3 = tpu.matmul %1, %2, %cst {dimension_numbers = #tpu.dot_dimension_numbers<[1], [0], [0], [1], [0, 0, 1, 1], [], []>} : vector<8x32xbf16>, vector<32x512xbf16>, vector<8x512xf32> -> vector<8x512xf32>
    %c0_3 = arith.constant 0 : index
    %c0_4 = arith.constant 0 : index
    %4 = vector.load %arg3[%c0_3, %c0_4] : memref<1x512xf32, #tpu.memory_space<vmem>>, vector<1x512xf32>
    %5 = vector.broadcast %4 : vector<1x512xf32> to vector<8x512xf32>
    %6 = arith.addf %3, %5 : vector<8x512xf32>
    %cst_5 = arith.constant 1.000000e-01 : f32
    %7 = vector.broadcast %cst_5 : f32 to vector<8x512xf32>
    %8 = arith.mulf %7, %6 : vector<8x512xf32>
    %9 = arith.maximumf %6, %8 : vector<8x512xf32>
    %10 = arith.truncf %9 : vector<8x512xf32> to vector<8x512xbf16>
    %c0_6 = arith.constant 0 : index
    %c0_7 = arith.constant 0 : index
    %11 = vector.load %arg4[%c0_6, %c0_7] : memref<512x128xbf16, #tpu.memory_space<vmem>>, vector<512x128xbf16>
    %cst_8 = arith.constant dense<0.000000e+00> : vector<8x128xf32>
    %12 = tpu.matmul %10, %11, %cst_8 {dimension_numbers = #tpu.dot_dimension_numbers<[1], [0], [0], [1], [0, 0, 1, 1], [], []>} : vector<8x512xbf16>, vector<512x128xbf16>, vector<8x128xf32> -> vector<8x128xf32>
    %c0_9 = arith.constant 0 : index
    %c0_10 = arith.constant 0 : index
    %13 = vector.load %arg5[%c0_9, %c0_10] : memref<1x128xf32, #tpu.memory_space<vmem>>, vector<1x128xf32>
    %14 = vector.broadcast %13 : vector<1x128xf32> to vector<8x128xf32>
    %15 = arith.addf %12, %14 : vector<8x128xf32>
    %16 = arith.truncf %15 : vector<8x128xf32> to vector<8x128xbf16>
    %c0_11 = arith.constant 0 : index
    %c0_12 = arith.constant 0 : index
    %17 = vector.load %arg6[%c0_11, %c0_12] : memref<8x128xbf16, #tpu.memory_space<vmem>>, vector<8x128xbf16>
    tpu.vector_store %arg6[%c0_11, %c0_12], %16 {strides = array<i32>} : memref<8x128xbf16, #tpu.memory_space<vmem>>, vector<8x128xbf16>,
    return
  }
  func.func @transform_0(%arg0: i32) -> (i32, i32) {
    %c0_i32 = arith.constant 0 : i32
    %c0_i32_0 = arith.constant 0 : i32
    return %arg0, %c0_i32 : i32, i32
  }
  func.func @transform_1(%arg0: i32) -> (i32, i32) {
    %c0_i32 = arith.constant 0 : i32
    %c0_i32_0 = arith.constant 0 : i32
    %c0_i32_1 = arith.constant 0 : i32
    return %c0_i32, %c0_i32_0 : i32, i32
  }
  func.func @transform_2(%arg0: i32) -> (i32, i32) {
    %c0_i32 = arith.constant 0 : i32
    %c0_i32_0 = arith.constant 0 : i32
    %c0_i32_1 = arith.constant 0 : i32
    return %c0_i32, %c0_i32_0 : i32, i32
  }
  func.func @transform_3(%arg0: i32) -> (i32, i32) {
    %c0_i32 = arith.constant 0 : i32
    %c0_i32_0 = arith.constant 0 : i32
    %c0_i32_1 = arith.constant 0 : i32
    return %c0_i32, %c0_i32_0 : i32, i32
  }
  func.func @transform_4(%arg0: i32) -> (i32, i32) {
    %c0_i32 = arith.constant 0 : i32
    %c0_i32_0 = arith.constant 0 : i32
    %c0_i32_1 = arith.constant 0 : i32
    return %c0_i32, %c0_i32_0 : i32, i32
  }
  func.func @transform_5(%arg0: i32) -> (i32, i32) {
    %c0_i32 = arith.constant 0 : i32
    %c0_i32_0 = arith.constant 0 : i32
    return %arg0, %c0_i32 : i32, i32
  }
}

</mosaic_0001>

<llo_original>
// kernel: tpu_custom_call.1
$region0: #{tpu_custom_call.1}
  #allocation0 [shape = 'u32[]', space=smem, size = 0x4, offset = 0x4, fixed_abs, tag = 'smem constant byte address 0x4 - core index']
  #allocation1 [shape = 'u32[72,128]{1,0:T(1,128)}', space=vmem, size = 0x9000, scoped, tag = 'internal scratch']
  %s0 = inlined_call_operand.hbm [shape: f32[8,32], index: 0, kind: input, shape index: {}]
  %s1 = inlined_call_operand.hbm [shape: bf16[32,512], index: 1, kind: input, shape index: {}]
  %s2 = inlined_call_operand.hbm [shape: f32[1,512], index: 2, kind: input, shape index: {}]
  %s3 = inlined_call_operand.hbm [shape: bf16[512,128], index: 3, kind: input, shape index: {}]
  %s4 = inlined_call_operand.vmem [shape: f32[1,128], index: 4, kind: input, shape index: {}]
  %s5 = inlined_call_operand.hbm [shape: bf16[8,128], index: 5, kind: output, shape index: {}]
  %s6 = sld [smem:[#allocation0]]
  $region46: #{tpu_custom_call.1} parent=0
    _
  %s8 = ssub.s32 1, %s6
  %s9 = scalar_select 0, %s8, %s6
  $region1: #{tpu_custom_call.1} parent=0
    #allocation2 [shape = 'u8[4096]{0}', space=vmem, size = 0x1000, scoped, tag = 'input window, operand 0, single buffered']
    #allocation3 [shape = 's32[1]{0}', space=sflag, size = 0x4, scoped, tag = 'scoped memory for tpu_custom_call.1']
    #allocation4 [shape = 's32[1]{0}', space=sflag, size = 0x4, scoped, tag = 'scoped memory for tpu_custom_call.1']
    #allocation5 [shape = 'u8[32768]{0}', space=vmem, size = 0x8000, scoped, tag = 'input window, operand 1, single buffered']
    #allocation6 [shape = 's32[1]{0}', space=sflag, size = 0x4, scoped, tag = 'scoped memory for tpu_custom_call.1']
    #allocation7 [shape = 'u8[2048]{0}', space=vmem, size = 0x800, scoped, tag = 'input window, operand 2, single buffered']
    #allocation8 [shape = 'u8[131072]{0}', space=vmem, size = 0x20000, scoped, tag = 'input window, operand 3, single buffered']
    #allocation9 [shape = 's32[1]{0}', space=sflag, size = 0x4, scoped, tag = 'scoped memory for tpu_custom_call.1']
    #allocation10 [shape = 'u8[2048]{0}', space=vmem, size = 0x800, scoped, tag = 'output window, operand 0, single buffered']
    %10 = vsyncpa [#allocation3], 0
    %11 = vsyncpa [#allocation6], 0
    %12 = vsyncpa [#allocation9], 0
    %13 = vsyncpa [#allocation4], 0
    // Predicated region
    $region2: #{tpu_custom_call.1} parent=1 // pred_check
      _
    $region3: #{tpu_custom_call.1} parent=1 // pred_check_branch
      %15 = sbr.rel (0) target = $region5
    $region4: #{tpu_custom_call.1} parent=1 // pred_region
      %17 = vsyncadd [#allocation3], 0
      %s19 = sshll.u32 %s0, 4
      %s20 = int_to_ptr.hbm [resolvable:$true] %s19
      %s21 = sshll.u32 [#allocation2], 4
      %s22 = int_to_ptr.vmem [resolvable:$true] %s21
      %24 = dma.hbm_to_vmem [thread:$0]  %s20, 128, %s22, [#allocation3]
    $region5: #{tpu_custom_call.1} parent=1 // pred_fallthru
      _
    // Predicated region
    $region6: #{tpu_custom_call.1} parent=1 // pred_check
      _
    $region7: #{tpu_custom_call.1} parent=1 // pred_check_branch
      %26 = sbr.rel (0) target = $region9
    $region8: #{tpu_custom_call.1} parent=1 // pred_region
      %28 = vsyncadd [#allocation6], 0
      %s29 = sshll.u32 %s1, 4
      %s30 = int_to_ptr.hbm [resolvable:$true] %s29
      %s31 = sshll.u32 [#allocation5], 4
      %s32 = int_to_ptr.vmem [resolvable:$true] %s31
      %37 = dma.hbm_to_vmem [thread:$0]  %s30, 1024, %s32, [#allocation6], 256, 256, 16
    $region9: #{tpu_custom_call.1} parent=1 // pred_fallthru
      _
    // Predicated region
    $region10: #{tpu_custom_call.1} parent=1 // pred_check
      _
    $region11: #{tpu_custom_call.1} parent=1 // pred_check_branch
      %39 = sbr.rel (0) target = $region13
    $region12: #{tpu_custom_call.1} parent=1 // pred_region
      %41 = vsyncadd [#allocation6], 0
      %s43 = sshll.u32 %s2, 4
      %s44 = int_to_ptr.hbm [resolvable:$true] %s43
      %s45 = sshll.u32 [#allocation7], 4
      %s46 = int_to_ptr.vmem [resolvable:$true] %s45
      %48 = dma.hbm_to_vmem [thread:$0]  %s44, 64, %s46, [#allocation6]
    $region13: #{tpu_custom_call.1} parent=1 // pred_fallthru
      _
    // Predicated region
    $region14: #{tpu_custom_call.1} parent=1 // pred_check
      _
    $region15: #{tpu_custom_call.1} parent=1 // pred_check_branch
      %50 = sbr.rel (0) target = $region17
    $region16: #{tpu_custom_call.1} parent=1 // pred_region
      %52 = vsyncadd [#allocation9], 0
      %s53 = sshll.u32 %s3, 4
      %s54 = int_to_ptr.hbm [resolvable:$true] %s53
      %s55 = sshll.u32 [#allocation8], 4
      %s56 = int_to_ptr.vmem [resolvable:$true] %s55
      %61 = dma.hbm_to_vmem [thread:$0]  %s54, 4096, %s56, [#allocation9], 64, 64, 4
    $region17: #{tpu_custom_call.1} parent=1 // pred_fallthru
      _
    // Predicated region
    $region18: #{tpu_custom_call.1} parent=1 // pred_check
      _
    $region19: #{tpu_custom_call.1} parent=1 // pred_check_branch
      %63 = sbr.rel (0) target = $region21
    $region20: #{tpu_custom_call.1} parent=1 // pred_region
      _
    $region21: #{tpu_custom_call.1} parent=1 // pred_fallthru
      _
    // Predicated region
    $region22: #{tpu_custom_call.1} parent=1 // pred_check
      _
    $region23: #{tpu_custom_call.1} parent=1 // pred_check_branch
      %65 = sbr.rel (0) target = $region25
    $region24: #{tpu_custom_call.1} parent=1 // pred_region
      %67 = dma.done [#allocation3], 128
    $region25: #{tpu_custom_call.1} parent=1 // pred_fallthru
      _
    // Predicated region
    $region26: #{tpu_custom_call.1} parent=1 // pred_check
      _
    $region27: #{tpu_custom_call.1} parent=1 // pred_check_branch
      %69 = sbr.rel (0) target = $region29
    $region28: #{tpu_custom_call.1} parent=1 // pred_region
      %71 = dma.done [#allocation6], 1024
    $region29: #{tpu_custom_call.1} parent=1 // pred_fallthru
      _
    // Predicated region
    $region30: #{tpu_custom_call.1} parent=1 // pred_check
      _
    $region31: #{tpu_custom_call.1} parent=1 // pred_check_branch
      %73 = sbr.rel (0) target = $region33
    $region32: #{tpu_custom_call.1} parent=1 // pred_region
      %75 = dma.done [#allocation6], 64
    $region33: #{tpu_custom_call.1} parent=1 // pred_fallthru
      _
    // Predicated region
    $region34: #{tpu_custom_call.1} parent=1 // pred_check
      _
    $region35: #{tpu_custom_call.1} parent=1 // pred_check_branch
      %77 = sbr.rel (0) target = $region37
    $region36: #{tpu_custom_call.1} parent=1 // pred_region
      %79 = dma.done [#allocation9], 4096
    $region37: #{tpu_custom_call.1} parent=1 // pred_fallthru
      _
    %v81 = vld [vmem:[#allocation2] sm:$0xff]
    %v82 = vpack.c.bf16 %v81, %v81
    %v83 = vld [vmem:[#allocation5] sm:$0xff]
    %v84 = vld [vmem:[#allocation5 + $0x8] sm:$0xff]
    %v85 = vld [vmem:[#allocation5 + $0x10] sm:$0xff]
    %v86 = vld [vmem:[#allocation5 + $0x18] sm:$0xff]
    %v87 = vld [vmem:[#allocation5 + $0x20] sm:$0xff]
    %v88 = vld [vmem:[#allocation5 + $0x28] sm:$0xff]
    %v89 = vld [vmem:[#allocation5 + $0x30] sm:$0xff]
    %v90 = vld [vmem:[#allocation5 + $0x38] sm:$0xff]
    %v91 = vld [vmem:[#allocation7] sm:$0xf]
    %v93 = vperm.slane %v91, 0
    %v94 = vperm.slane %v91, 1
    %v95 = vperm.slane %v91, 2
    %v96 = vperm.slane %v91, 3
    %v109 = vunpack.c.l.b16 %v83
    %v110 = vunpack.c.h.b16 %v83
    %v111 = vunpack.c.l.b16 %v84
    %v112 = vunpack.c.h.b16 %v84
    %v113 = vunpack.c.l.b16 %v85
    %v114 = vunpack.c.h.b16 %v85
    %v115 = vunpack.c.l.b16 %v86
    %v116 = vunpack.c.h.b16 %v86
    %v117 = vunpack.c.l.b16 %v87
    %v118 = vunpack.c.h.b16 %v87
    %v119 = vunpack.c.l.b16 %v88
    %v120 = vunpack.c.h.b16 %v88
    %v121 = vunpack.c.l.b16 %v89
    %v122 = vunpack.c.h.b16 %v89
    %v123 = vunpack.c.l.b16 %v90
    %v124 = vunpack.c.h.b16 %v90
    %v125 = vpack.c.b16 %v113, %v109
    %v126 = vpack.c.b16 %v114, %v110
    %v127 = vpack.c.b16 %v115, %v111
    %v128 = vpack.c.b16 %v116, %v112
    %v129 = vpack.c.b16 %v121, %v117
    %v130 = vpack.c.b16 %v122, %v118
    %v131 = vpack.c.b16 %v123, %v119
    %v132 = vpack.c.b16 %v124, %v120
    %vm141 = vcmask 261120
    %v143 = vsel %vm141, %v82, 0
    %145 = vmatpush.bf16.msra.mxu0 0
    %146 = vmatpush.bf16.msra.mxu0 0
    %147 = vmatpush.bf16.msra.mxu0 0
    %148 = vmatpush.bf16.msra.mxu0 0
    %149 = vmatpush.bf16.msra.mxu0 0
    %150 = vmatpush.bf16.msra.mxu0 0
    %151 = vmatpush.bf16.msra.mxu0 %v129
    %152 = vmatpush.bf16.msra.mxu0 %v125
    %153 = vmatmul.bf16.gmra.mxu0 %v143
    %v154 = vpop.f32.mrf.mxu0
    %v155 = vadd.f32 %v93, %v154
    %v156 = vpop.f32.mrf.mxu0
    %157 = vdwg.mxu0
    %158 = vmatpush.bf16.msra.mxu0 0
    %159 = vmatpush.bf16.msra.mxu0 0
    %160 = vmatpush.bf16.msra.mxu0 0
    %161 = vmatpush.bf16.msra.mxu0 0
    %162 = vmatpush.bf16.msra.mxu0 0
    %163 = vmatpush.bf16.msra.mxu0 0
    %164 = vmatpush.bf16.msra.mxu0 %v130
    %165 = vmatpush.bf16.msra.mxu0 %v126
    %166 = vmatmul.bf16.gmra.mxu0 %v143
    %v167 = vpop.f32.mrf.mxu0
    %v168 = vadd.f32 %v94, %v167
    %v169 = vpop.f32.mrf.mxu0
    %170 = vdwg.mxu0
    %171 = vmatpush.bf16.msra.mxu0 0
    %172 = vmatpush.bf16.msra.mxu0 0
    %173 = vmatpush.bf16.msra.mxu0 0
    %174 = vmatpush.bf16.msra.mxu0 0
    %175 = vmatpush.bf16.msra.mxu0 0
    %176 = vmatpush.bf16.msra.mxu0 0
    %177 = vmatpush.bf16.msra.mxu0 %v131
    %178 = vmatpush.bf16.msra.mxu0 %v127
    %179 = vmatmul.bf16.gmra.mxu0 %v143
    %v180 = vpop.f32.mrf.mxu0
    %v181 = vadd.f32 %v95, %v180
    %v182 = vpop.f32.mrf.mxu0
    %183 = vdwg.mxu0
    %184 = vmatpush.bf16.msra.mxu0 0
    %185 = vmatpush.bf16.msra.mxu0 0
    %186 = vmatpush.bf16.msra.mxu0 0
    %187 = vmatpush.bf16.msra.mxu0 0
    %188 = vmatpush.bf16.msra.mxu0 0
    %189 = vmatpush.bf16.msra.mxu0 0
    %190 = vmatpush.bf16.msra.mxu0 %v132
    %191 = vmatpush.bf16.msra.mxu0 %v128
    %192 = vmatmul.bf16.gmra.mxu0 %v143
    %v193 = vpop.f32.mrf.mxu0
    %v194 = vadd.f32 %v96, %v193
    %v195 = vpop.f32.mrf.mxu0
    %196 = vdwg.mxu0
    %v197 = vmul.f32 %v155, 0.1
    %v198 = vmul.f32 %v168, 0.1
    %v199 = vmul.f32 %v181, 0.1
    %v200 = vmul.f32 %v194, 0.1
    %v201 = vmax.f32 %v155, %v197
    %v202 = vmax.f32 %v168, %v198
    %v203 = vmax.f32 %v181, %v199
    %v204 = vmax.f32 %v194, %v200
    %v205 = vpack.c.bf16 %v201, %v201
    %v206 = vpack.c.bf16 %v202, %v202
    %v207 = vpack.c.bf16 %v203, %v203
    %v208 = vpack.c.bf16 %v204, %v204
    %v209 = vld [vmem:[#allocation8] sm:$0xf]
    %v210 = vld [vmem:[#allocation8 + $0x4] sm:$0xf]
    %v211 = vld [vmem:[#allocation8 + $0x8] sm:$0xf]
    %v212 = vld [vmem:[#allocation8 + $0xc] sm:$0xf]
    %v213 = vld [vmem:[#allocation8 + $0x10] sm:$0xf]
    %v214 = vld [vmem:[#allocation8 + $0x14] sm:$0xf]
    %v215 = vld [vmem:[#allocation8 + $0x18] sm:$0xf]
    %v216 = vld [vmem:[#allocation8 + $0x1c] sm:$0xf]
    %v217 = vld [vmem:[#allocation8 + $0x20] sm:$0xf]
    %v218 = vld [vmem:[#allocation8 + $0x24] sm:$0xf]
    %v219 = vld [vmem:[#allocation8 + $0x28] sm:$0xf]
    %v220 = vld [vmem:[#allocation8 + $0x2c] sm:$0xf]
    %v221 = vld [vmem:[#allocation8 + $0x30] sm:$0xf]
    %v222 = vld [vmem:[#allocation8 + $0x34] sm:$0xf]
    %v223 = vld [vmem:[#allocation8 + $0x38] sm:$0xf]
    %v224 = vld [vmem:[#allocation8 + $0x3c] sm:$0xf]
    %v225 = vld [vmem:[#allocation8 + $0x40] sm:$0xf]
    %v226 = vld [vmem:[#allocation8 + $0x44] sm:$0xf]
    %v227 = vld [vmem:[#allocation8 + $0x48] sm:$0xf]
    %v228 = vld [vmem:[#allocation8 + $0x4c] sm:$0xf]
    %v229 = vld [vmem:[#allocation8 + $0x50] sm:$0xf]
    %v230 = vld [vmem:[#allocation8 + $0x54] sm:$0xf]
    %v231 = vld [vmem:[#allocation8 + $0x58] sm:$0xf]
    %v232 = vld [vmem:[#allocation8 + $0x5c] sm:$0xf]
    %v233 = vld [vmem:[#allocation8 + $0x60] sm:$0xf]
    %v234 = vld [vmem:[#allocation8 + $0x64] sm:$0xf]
    %v235 = vld [vmem:[#allocation8 + $0x68] sm:$0xf]
    %v236 = vld [vmem:[#allocation8 + $0x6c] sm:$0xf]
    %v237 = vld [vmem:[#allocation8 + $0x70] sm:$0xf]
    %v238 = vld [vmem:[#allocation8 + $0x74] sm:$0xf]
    %v239 = vld [vmem:[#allocation8 + $0x78] sm:$0xf]
    %v240 = vld [vmem:[#allocation8 + $0x7c] sm:$0xf]
    %v241 = vld [vmem:[#allocation8 + $0x80] sm:$0xf]
    %v242 = vld [vmem:[#allocation8 + $0x84] sm:$0xf]
    %v243 = vld [vmem:[#allocation8 + $0x88] sm:$0xf]
    %v244 = vld [vmem:[#allocation8 + $0x8c] sm:$0xf]
    %v245 = vld [vmem:[#allocation8 + $0x90] sm:$0xf]
    %v246 = vld [vmem:[#allocation8 + $0x94] sm:$0xf]
    %v247 = vld [vmem:[#allocation8 + $0x98] sm:$0xf]
    %v248 = vld [vmem:[#allocation8 + $0x9c] sm:$0xf]
    %v249 = vld [vmem:[#allocation8 + $0xa0] sm:$0xf]
    %v250 = vld [vmem:[#allocation8 + $0xa4] sm:$0xf]
    %v251 = vld [vmem:[#allocation8 + $0xa8] sm:$0xf]
    %v252 = vld [vmem:[#allocation8 + $0xac] sm:$0xf]
    %v253 = vld [vmem:[#allocation8 + $0xb0] sm:$0xf]
    %v254 = vld [vmem:[#allocation8 + $0xb4] sm:$0xf]
    %v255 = vld [vmem:[#allocation8 + $0xb8] sm:$0xf]
    %v256 = vld [vmem:[#allocation8 + $0xbc] sm:$0xf]
    %v257 = vld [vmem:[#allocation8 + $0xc0] sm:$0xf]
    %v258 = vld [vmem:[#allocation8 + $0xc4] sm:$0xf]
    %v259 = vld [vmem:[#allocation8 + $0xc8] sm:$0xf]
    %v260 = vld [vmem:[#allocation8 + $0xcc] sm:$0xf]
    %v261 = vld [vmem:[#allocation8 + $0xd0] sm:$0xf]
    %v262 = vld [vmem:[#allocation8 + $0xd4] sm:$0xf]
    %v263 = vld [vmem:[#allocation8 + $0xd8] sm:$0xf]
    %v264 = vld [vmem:[#allocation8 + $0xdc] sm:$0xf]
    %v265 = vld [vmem:[#allocation8 + $0xe0] sm:$0xf]
    %v266 = vld [vmem:[#allocation8 + $0xe4] sm:$0xf]
    %v267 = vld [vmem:[#allocation8 + $0xe8] sm:$0xf]
    %v268 = vld [vmem:[#allocation8 + $0xec] sm:$0xf]
    %v269 = vld [vmem:[#allocation8 + $0xf0] sm:$0xf]
    %v270 = vld [vmem:[#allocation8 + $0xf4] sm:$0xf]
    %v271 = vld [vmem:[#allocation8 + $0xf8] sm:$0xf]
    %v272 = vld [vmem:[#allocation8 + $0xfc] sm:$0xf]
    %v273 = vld [vmem:[%s4] sm:$0x1]
    %v275 = vperm.slane %v273, 0
    %v341 = vunpack.c.l.b16 %v209
    %v342 = vunpack.c.l.b16 %v210
    %v343 = vunpack.c.l.b16 %v211
    %v344 = vunpack.c.l.b16 %v212
    %v345 = vunpack.c.l.b16 %v213
    %v346 = vunpack.c.l.b16 %v214
    %v347 = vunpack.c.l.b16 %v215
    %v348 = vunpack.c.l.b16 %v216
    %v349 = vunpack.c.l.b16 %v217
    %v350 = vunpack.c.l.b16 %v218
    %v351 = vunpack.c.l.b16 %v219
    %v352 = vunpack.c.l.b16 %v220
    %v353 = vunpack.c.l.b16 %v221
    %v354 = vunpack.c.l.b16 %v222
    %v355 = vunpack.c.l.b16 %v223
    %v356 = vunpack.c.l.b16 %v224
    %v357 = vunpack.c.l.b16 %v225
    %v358 = vunpack.c.l.b16 %v226
    %v359 = vunpack.c.l.b16 %v227
    %v360 = vunpack.c.l.b16 %v228
    %v361 = vunpack.c.l.b16 %v229
    %v362 = vunpack.c.l.b16 %v230
    %v363 = vunpack.c.l.b16 %v231
    %v364 = vunpack.c.l.b16 %v232
    %v365 = vunpack.c.l.b16 %v233
    %v366 = vunpack.c.l.b16 %v234
    %v367 = vunpack.c.l.b16 %v235
    %v368 = vunpack.c.l.b16 %v236
    %v369 = vunpack.c.l.b16 %v237
    %v370 = vunpack.c.l.b16 %v238
    %v371 = vunpack.c.l.b16 %v239
    %v372 = vunpack.c.l.b16 %v240
    %v373 = vunpack.c.l.b16 %v241
    %v374 = vunpack.c.l.b16 %v242
    %v375 = vunpack.c.l.b16 %v243
    %v376 = vunpack.c.l.b16 %v244
    %v377 = vunpack.c.l.b16 %v245
    %v378 = vunpack.c.l.b16 %v246
    %v379 = vunpack.c.l.b16 %v247
    %v380 = vunpack.c.l.b16 %v248
    %v381 = vunpack.c.l.b16 %v249
    %v382 = vunpack.c.l.b16 %v250
    %v383 = vunpack.c.l.b16 %v251
    %v384 = vunpack.c.l.b16 %v252
    %v385 = vunpack.c.l.b16 %v253
    %v386 = vunpack.c.l.b16 %v254
    %v387 = vunpack.c.l.b16 %v255
    %v388 = vunpack.c.l.b16 %v256
    %v389 = vunpack.c.l.b16 %v257
    %v390 = vunpack.c.l.b16 %v258
    %v391 = vunpack.c.l.b16 %v259
    %v392 = vunpack.c.l.b16 %v260
    %v393 = vunpack.c.l.b16 %v261
    %v394 = vunpack.c.l.b16 %v262
    %v395 = vunpack.c.l.b16 %v263
    %v396 = vunpack.c.l.b16 %v264
    %v397 = vunpack.c.l.b16 %v265
    %v398 = vunpack.c.l.b16 %v266
    %v399 = vunpack.c.l.b16 %v267
    %v400 = vunpack.c.l.b16 %v268
    %v401 = vunpack.c.l.b16 %v269
    %v402 = vunpack.c.l.b16 %v270
    %v403 = vunpack.c.l.b16 %v271
    %v404 = vunpack.c.l.b16 %v272
    %v405 = vpack.c.b16 %v342, %v341
    %v406 = vpack.c.b16 %v344, %v343
    %v407 = vpack.c.b16 %v346, %v345
    %v408 = vpack.c.b16 %v348, %v347
    %v409 = vpack.c.b16 %v350, %v349
    %v410 = vpack.c.b16 %v352, %v351
    %v411 = vpack.c.b16 %v354, %v353
    %v412 = vpack.c.b16 %v356, %v355
    %v413 = vpack.c.b16 %v358, %v357
    %v414 = vpack.c.b16 %v360, %v359
    %v415 = vpack.c.b16 %v362, %v361
    %v416 = vpack.c.b16 %v364, %v363
    %v417 = vpack.c.b16 %v366, %v365
    %v418 = vpack.c.b16 %v368, %v367
    %v419 = vpack.c.b16 %v370, %v369
    %v420 = vpack.c.b16 %v372, %v371
    %v421 = vpack.c.b16 %v374, %v373
    %v422 = vpack.c.b16 %v376, %v375
    %v423 = vpack.c.b16 %v378, %v377
    %v424 = vpack.c.b16 %v380, %v379
    %v425 = vpack.c.b16 %v382, %v381
    %v426 = vpack.c.b16 %v384, %v383
    %v427 = vpack.c.b16 %v386, %v385
    %v428 = vpack.c.b16 %v388, %v387
    %v429 = vpack.c.b16 %v390, %v389
    %v430 = vpack.c.b16 %v392, %v391
    %v431 = vpack.c.b16 %v394, %v393
    %v432 = vpack.c.b16 %v396, %v395
    %v433 = vpack.c.b16 %v398, %v397
    %v434 = vpack.c.b16 %v400, %v399
    %v435 = vpack.c.b16 %v402, %v401
    %v436 = vpack.c.b16 %v404, %v403
    %469 = vmatpush.bf16.msra.mxu0 %v412
    %470 = vmatpush.bf16.msra.mxu0 %v411
    %471 = vmatpush.bf16.msra.mxu0 %v410
    %472 = vmatpush.bf16.msra.mxu0 %v409
    %473 = vmatpush.bf16.msra.mxu0 %v408
    %474 = vmatpush.bf16.msra.mxu0 %v407
    %475 = vmatpush.bf16.msra.mxu0 %v406
    %476 = vmatpush.bf16.msra.mxu0 %v405
    %477 = vmatmul.bf16.gmra.mxu0 %v205
    %v478 = vpop.f32.mrf.mxu0
    %v479 = vadd.f32 %v275, %v478
    %v480 = vpop.f32.mrf.mxu0
    %481 = vdwg.mxu0
    %482 = vmatpush.bf16.msra.mxu0 %v420
    %483 = vmatpush.bf16.msra.mxu0 %v419
    %484 = vmatpush.bf16.msra.mxu0 %v418
    %485 = vmatpush.bf16.msra.mxu0 %v417
    %486 = vmatpush.bf16.msra.mxu0 %v416
    %487 = vmatpush.bf16.msra.mxu0 %v415
    %488 = vmatpush.bf16.msra.mxu0 %v414
    %489 = vmatpush.bf16.msra.mxu0 %v413
    %490 = vmatmul.bf16.gmra.mxu0 %v206
    %v491 = vpop.f32.mrf.mxu0
    %v492 = vadd.f32 %v479, %v491
    %v493 = vpop.f32.mrf.mxu0
    %494 = vdwg.mxu0
    %495 = vmatpush.bf16.msra.mxu0 %v428
    %496 = vmatpush.bf16.msra.mxu0 %v427
    %497 = vmatpush.bf16.msra.mxu0 %v426
    %498 = vmatpush.bf16.msra.mxu0 %v425
    %499 = vmatpush.bf16.msra.mxu0 %v424
    %500 = vmatpush.bf16.msra.mxu0 %v423
    %501 = vmatpush.bf16.msra.mxu0 %v422
    %502 = vmatpush.bf16.msra.mxu0 %v421
    %503 = vmatmul.bf16.gmra.mxu0 %v207
    %v504 = vpop.f32.mrf.mxu0
    %v505 = vadd.f32 %v492, %v504
    %v506 = vpop.f32.mrf.mxu0
    %507 = vdwg.mxu0
    %508 = vmatpush.bf16.msra.mxu0 %v436
    %509 = vmatpush.bf16.msra.mxu0 %v435
    %510 = vmatpush.bf16.msra.mxu0 %v434
    %511 = vmatpush.bf16.msra.mxu0 %v433
    %512 = vmatpush.bf16.msra.mxu0 %v432
    %513 = vmatpush.bf16.msra.mxu0 %v431
    %514 = vmatpush.bf16.msra.mxu0 %v430
    %515 = vmatpush.bf16.msra.mxu0 %v429
    %516 = vmatmul.bf16.gmra.mxu0 %v208
    %v517 = vpop.f32.mrf.mxu0
    %v518 = vadd.f32 %v505, %v517
    %v519 = vpop.f32.mrf.mxu0
    %520 = vdwg.mxu0
    %v521 = vpack.c.bf16 %v518, %v518
    %522 = vst [vmem:[#allocation10] sm:$0xf] %v521
    // Predicated region
    $region38: #{tpu_custom_call.1} parent=1 // pred_check
      _
    $region39: #{tpu_custom_call.1} parent=1 // pred_check_branch
      %524 = sbr.rel (0) target = $region41
    $region40: #{tpu_custom_call.1} parent=1 // pred_region
      %526 = vsyncadd [#allocation4], 0
      %s528 = sshll.u32 [#allocation10], 4
      %s529 = int_to_ptr.vmem [resolvable:$true] %s528
      %s530 = sshll.u32 %s5, 4
      %s531 = int_to_ptr.hbm [resolvable:$true] %s530
      %533 = dma.vmem_to_hbm [thread:$0]  %s529, 64, %s531, [#allocation4]
    $region41: #{tpu_custom_call.1} parent=1 // pred_fallthru
      _
    // Predicated region
    $region42: #{tpu_custom_call.1} parent=1 // pred_check
      _
    $region43: #{tpu_custom_call.1} parent=1 // pred_check_branch
      %535 = sbr.rel (0) target = $region45
    $region44: #{tpu_custom_call.1} parent=1 // pred_region
      %537 = dma.done [#allocation4], 64
    $region45: #{tpu_custom_call.1} parent=1 // pred_fallthru
      _
    %538 = vsyncpa [#allocation3], 1
    %539 = vsyncpa [#allocation6], 1
    %540 = vsyncpa [#allocation9], 1
    %541 = vsyncpa [#allocation4], 1

</llo_original>
